<compile_context>
chip_gen: v7x
topology: tpu7x:2x2x1
jax: 0.10.0
libtpu: 0.0.40
codegen_flags: <defaults>
</compile_context>

<pallas_src>
import jax
import jax.numpy as jnp
from jax.experimental import pallas as pl
from jax.experimental.pallas import tpu as pltpu


def _pick_tile(dim, target, quantum):
    """Largest power-of-two-ish tile <= target that divides dim and respects the
    (8,128) quantum; falls back to the full dim.
    # TODO(synk): replace full-dim fallback with pl.cdiv grids + masked edge tiles.
    """
    t = target
    while t >= quantum:
        if dim % t == 0:
            return t
        t //= 2
    return dim


# -----------------------------------------------------------------------------------
# Tiled linear:  y[b, rows, cols] = x[b, rows, :] @ w_t[:, cols] + bias[cols]
# Grid = (col-tiles, batch, row-tiles, k-tiles); K is the innermost reduction axis,
# accumulated in an f32 VMEM scratch (pl.when init / finalize).
# -----------------------------------------------------------------------------------
def _linear_kernel(x_ref, w_ref, b_ref, o_ref, acc_ref):
    kk = pl.program_id(3)

    @pl.when(kk == 0)
    def _():
        acc_ref[...] = jnp.zeros(acc_ref.shape, acc_ref.dtype)

    acc_ref[...] += jnp.dot(x_ref[...], w_ref[...],
                            preferred_element_type=jnp.float32)

    @pl.when(kk == pl.num_programs(3) - 1)
    def _():
        # Bias is kept in f32 and added once to the f32 accumulator.
        o_ref[...] = (acc_ref[...] + b_ref[...]).astype(o_ref.dtype)


def _linear(x, w_t, bias_row, *, out_dtype=None, row_tile=256, col_tile=256,
            k_tile=512):
    B, N, K = x.shape
    Kw, Cout = w_t.shape
    assert Kw == K
    out_dtype = out_dtype if out_dtype is not None else x.dtype

    tn = _pick_tile(N, row_tile, 8)       # sublane dim of x / out blocks
    tc = _pick_tile(Cout, col_tile, 128)  # lane dim of w / bias / out blocks
    tk = _pick_tile(K, k_tile, 128)       # lane dim of x block, sublane of w block

    grid = (Cout // tc, B, N // tn, K // tk)
    x_b = x.dtype.itemsize
    w_b = w_t.dtype.itemsize

    return pl.pallas_call(
        _linear_kernel,
        out_shape=jax.ShapeDtypeStruct((B, N, Cout), out_dtype),
        grid_spec=pltpu.PrefetchScalarGridSpec(
            num_scalar_prefetch=0,
            grid=grid,
            in_specs=[
                pl.BlockSpec((None, tn, tk), lambda j, b, i, kk: (b, i, kk)),  # x
                pl.BlockSpec((tk, tc), lambda j, b, i, kk: (kk, j)),           # weight
                pl.BlockSpec((1, tc), lambda j, b, i, kk: (0, j)),             # bias
            ],
            out_specs=pl.BlockSpec((None, tn, tc), lambda j, b, i, kk: (b, i, j)),
            scratch_shapes=[pltpu.VMEM((tn, tc), jnp.float32)],
        ),
        compiler_params=pltpu.CompilerParams(
            dimension_semantics=("parallel", "parallel", "parallel", "arbitrary"),
            vmem_limit_bytes=64 * 1024 * 1024,  # TODO(synk): re-derive per chip
        ),
        cost_estimate=pl.CostEstimate(
            flops=2 * B * N * K * Cout,
            transcendentals=0,
            bytes_accessed=(B * (N // tn) * K * Cout * w_b          # weight re-reads
                            + (Cout // tc) * B * N * K * x_b        # x re-reads
                            + B * N * Cout * jnp.dtype(out_dtype).itemsize),
        ),
    )(x, w_t, bias_row)


# -----------------------------------------------------------------------------------
# Flash attention.  Grid = (B, q-tiles, kv-tiles); all heads handled per block.
# Reads q/k/v straight out of the fused (B, N, 3, H, D) QKV tensor (no wrapper
# transposes) and writes the output in (B, N, H, D) so merging heads is a free
# reshape.  Online softmax state is per-head f32 VMEM scratch.
# -----------------------------------------------------------------------------------
def _flash_kernel(q_ref, k_ref, v_ref, o_ref, m_sc, l_sc, acc_sc, qh_sc):
    H = q_ref.shape[1]
    ki = pl.program_id(2)
    last = pl.num_programs(2) - 1

    @pl.when(ki == 0)
    def _():
        m_sc[...] = jnp.full(m_sc.shape, -jnp.inf, dtype=m_sc.dtype)
        l_sc[...] = jnp.zeros(l_sc.shape, dtype=l_sc.dtype)
        acc_sc[...] = jnp.zeros(acc_sc.shape, dtype=acc_sc.dtype)
        # Re-pack Q per head once per q-tile so the inner kv loop reads clean
        # contiguous (tq, D) tiles instead of lane-slicing every step.
        for h in range(H):
            qh_sc[h] = q_ref[:, h, :]

    for h in range(H):                      # static unroll over heads
        k_h = k_ref[:, h, :]                # (tk, D)
        v_h = v_ref[:, h, :]                # (tk, D)
        # q @ k^T without materializing a transpose; Q already carries D**-0.5.
        s = jax.lax.dot_general(
            qh_sc[h], k_h, (((1,), (1,)), ((), ())),
            preferred_element_type=jnp.float32)            # (tq, tk) f32

        m_prev = m_sc[h]                                    # (tq, 1)
        m_new = jnp.maximum(m_prev, jnp.max(s, axis=-1, keepdims=True))
        alpha = jnp.exp(m_prev - m_new)
        p = jnp.exp(s - m_new)                              # f32 exp (safe on v5e too)
        # (tq, 1) scratch stores are masked vst; accepted knowingly (tiny per step).
        l_sc[h] = alpha * l_sc[h] + jnp.sum(p, axis=-1, keepdims=True)
        acc_sc[h] = alpha * acc_sc[h] + jnp.dot(
            p.astype(v_h.dtype), v_h, preferred_element_type=jnp.float32)
        m_sc[h] = m_new

        @pl.when(ki == last)
        def _():
            o_ref[:, h, :] = (acc_sc[h] * pl.reciprocal(l_sc[h], approx=True)
                              ).astype(o_ref.dtype)


def _flash_attention(qkv, *, q_tile=512, kv_tile=256):
    """qkv: (B, N, 3, H, D), Q columns already scaled. Returns (B, N, H, D)."""
    B, N, three, H, D = qkv.shape
    assert three == 3
    tq = _pick_tile(N, q_tile, 8)
    tk = _pick_tile(N, kv_tile, 8)
    grid = (B, N // tq, N // tk)
    itm = qkv.dtype.itemsize

    return pl.pallas_call(
        _flash_kernel,
        out_shape=jax.ShapeDtypeStruct((B, N, H, D), qkv.dtype),
        grid_spec=pltpu.PrefetchScalarGridSpec(
            num_scalar_prefetch=0,
            grid=grid,
            in_specs=[
                pl.BlockSpec((None, tq, None, H, D),
                             lambda b, qi, ki: (b, qi, 0, 0, 0)),   # Q slab
                pl.BlockSpec((None, tk, None, H, D),
                             lambda b, qi, ki: (b, ki, 1, 0, 0)),   # K slab
                pl.BlockSpec((None, tk, None, H, D),
                             lambda b, qi, ki: (b, ki, 2, 0, 0)),   # V slab
            ],
            out_specs=pl.BlockSpec((None, tq, H, D),
                                   lambda b, qi, ki: (b, qi, 0, 0)),
            scratch_shapes=[
                pltpu.VMEM((H, tq, 1), jnp.float32),   # running row max
                pltpu.VMEM((H, tq, 1), jnp.float32),   # running denominator
                pltpu.VMEM((H, tq, D), jnp.float32),   # output accumulator
                pltpu.VMEM((H, tq, D), qkv.dtype),     # per-head repacked Q
            ],
        ),
        compiler_params=pltpu.CompilerParams(
            dimension_semantics=("parallel", "parallel", "arbitrary"),
            vmem_limit_bytes=64 * 1024 * 1024,  # TODO(synk): re-derive per chip
        ),
        cost_estimate=pl.CostEstimate(
            flops=4 * B * H * N * N * D,
            transcendentals=B * H * N * N,
            bytes_accessed=(B * N * H * D * itm                    # Q read once
                            + 2 * (N // tq) * B * N * H * D * itm  # K/V re-streamed
                            + B * N * H * D * itm),                # output
        ),
    )(qkv, qkv, qkv)


# -----------------------------------------------------------------------------------
# Full module forward (matches nn.Module semantics: qkv -> per-head softmax -> proj).
# -----------------------------------------------------------------------------------
def attention_forward(x, wqkv, bqkv, wproj, bproj, num_heads):
    B, N, C = x.shape
    H = num_heads
    D = C // H
    scale = D ** (-0.5)
    f32 = jnp.float32
    cdt = jnp.bfloat16  # MXU operand dtype; accumulation stays f32 inside kernels.

    # One-time host-side parameter prep, all in f32 BEFORE the bf16 cast:
    #   nn.Linear weights transposed to (in, out); softmax scale folded into the
    #   Q columns of the QKV projection; biases stay f32.
    col_scale = jnp.concatenate(
        [jnp.full((C,), scale, dtype=f32), jnp.ones((2 * C,), dtype=f32)]
    )
    wqkv_t = (wqkv.astype(f32).T * col_scale[None, :]).astype(cdt)   # (C, 3C) bf16
    bqkv_s = (bqkv.astype(f32) * col_scale).reshape(1, 3 * C)        # (1, 3C) f32
    wproj_t = wproj.astype(f32).T.astype(cdt)                        # (C, C)  bf16
    bproj_r = bproj.astype(f32).reshape(1, C)                        # (1, C)  f32

    # 1) Fused QKV projection (bf16 operands, f32 accumulate, bf16 out).
    qkv = _linear(x.astype(cdt), wqkv_t, bqkv_s, out_dtype=cdt)      # (B, N, 3C)

    # 2) Flash attention reads q/k/v straight from the fused layout (free reshape).
    qkv5 = qkv.reshape(B, N, 3, H, D)
    attn = _flash_attention(qkv5)                                    # (B, N, H, D)

    # 3) Merge heads (free reshape) + output projection back to the input dtype.
    return _linear(attn.reshape(B, N, C), wproj_t, bproj_r, out_dtype=x.dtype)


def attention_reference(x, wqkv, bqkv, wproj, bproj, num_heads):
    """Pure-JAX f32 reference mirroring the PyTorch forward exactly."""
    B, N, C = x.shape
    D = C // num_heads
    qkv = x @ wqkv.T + bqkv
    qkv = qkv.reshape(B, N, 3, num_heads, D).transpose(2, 0, 3, 1, 4)
    q, k, v = qkv[0], qkv[1], qkv[2]
    attn = jnp.einsum('bhnd,bhmd->bhnm', q, k) * (D ** (-0.5))
    attn = jax.nn.softmax(attn, axis=-1)
    out = jnp.einsum('bhnm,bhmd->bhnd', attn, v)
    out = out.transpose(0, 2, 1, 3).reshape(B, N, C)
    return out @ wproj.T + bproj


if __name__ == "__main__":
    B, N, C = 2, 8, 32
    num_heads = 4

    key = jax.random.PRNGKey(0)
    kx, k1, k2, k3, k4 = jax.random.split(key, 5)

    # Deterministic synthetic parameters (nn.Linear shapes: W (out, in), b (out,)).
    x = jax.random.normal(kx, (B, N, C), dtype=jnp.float32)
    wqkv = jax.random.normal(k1, (3 * C, C), dtype=jnp.float32) * 0.05
    bqkv = jax.random.normal(k2, (3 * C,), dtype=jnp.float32) * 0.05
    wproj = jax.random.normal(k3, (C, C), dtype=jnp.float32) * 0.05
    bproj = jax.random.normal(k4, (C,), dtype=jnp.float32) * 0.05

    out = attention_forward(x, wqkv, bqkv, wproj, bproj, num_heads)
    out = jax.block_until_ready(out)

    ref = attention_reference(x, wqkv, bqkv, wproj, bproj, num_heads)
    assert out.shape == (B, N, C)
    # bf16 MXU operands (f32 accumulation) => relaxed tolerance vs the f32 reference.
    assert jnp.allclose(out, ref, atol=2e-2, rtol=2e-2), "mismatch vs reference"

    print("KERNEL_OK")
</pallas_src>

<mosaic_0001>
module attributes {stable_mosaic.version = 11 : i64} {
  func.func @_linear_kernel(%arg0: i32, %arg1: i32, %arg2: i32, %arg3: i32, %arg4: memref<1x8x32xbf16, #tpu.memory_space<vmem>>, %arg5: memref<32x96xbf16, #tpu.memory_space<vmem>>, %arg6: memref<1x96xf32, #tpu.memory_space<vmem>>, %arg7: memref<1x8x96xbf16, #tpu.memory_space<vmem>>, %arg8: memref<8x96xf32, #tpu.memory_space<vmem>>) attributes {dimension_semantics = [#tpu.dimension_semantics<parallel>, #tpu.dimension_semantics<parallel>, #tpu.dimension_semantics<parallel>, #tpu.dimension_semantics<arbitrary>], iteration_bounds = array<i64: 1, 2, 1, 1>, scalar_prefetch = 0 : i64, scratch_operands = 1 : i64, tpu.core_type = #tpu.core_type<tc>, window_params = [{transform_indices = @transform_0, window_bounds = array<i64: 1, 8, 32>}, {transform_indices = @transform_1, window_bounds = array<i64: 32, 96>}, {transform_indices = @transform_2, window_bounds = array<i64: 1, 96>}, {transform_indices = @transform_3, window_bounds = array<i64: 1, 8, 96>}]} {
    %c0_i32 = arith.constant 0 : i32
    %0 = arith.cmpi eq, %arg3, %c0_i32 : i32
    %1 = arith.extui %0 : i1 to i32
    %c0_i32_0 = arith.constant 0 : i32
    %2 = arith.cmpi ne, %1, %c0_i32_0 : i32
    scf.if %2 {
      %cst_11 = arith.constant 0.000000e+00 : f32
      %13 = vector.broadcast %cst_11 : f32 to vector<8x96xf32>
      %c0_12 = arith.constant 0 : index
      %c0_13 = arith.constant 0 : index
      %14 = vector.load %arg8[%c0_12, %c0_13] : memref<8x96xf32, #tpu.memory_space<vmem>>, vector<8x96xf32>
      tpu.vector_store %arg8[%c0_12, %c0_13], %13 {strides = array<i32>} : memref<8x96xf32, #tpu.memory_space<vmem>>, vector<8x96xf32>,
    } else {
    }
    %c0 = arith.constant 0 : index
    %c0_1 = arith.constant 0 : index
    %3 = vector.load %arg8[%c0, %c0_1] : memref<8x96xf32, #tpu.memory_space<vmem>>, vector<8x96xf32>
    %c0_2 = arith.constant 0 : index
    %c0_3 = arith.constant 0 : index
    %c0_4 = arith.constant 0 : index
    %4 = vector.load %arg4[%c0_2, %c0_3, %c0_4] : memref<1x8x32xbf16, #tpu.memory_space<vmem>>, vector<1x8x32xbf16>
    %5 = vector.shape_cast %4 : vector<1x8x32xbf16> to vector<8x32xbf16>
    %c0_5 = arith.constant 0 : index
    %c0_6 = arith.constant 0 : index
    %6 = vector.load %arg5[%c0_5, %c0_6] : memref<32x96xbf16, #tpu.memory_space<vmem>>, vector<32x96xbf16>
    %cst = arith.constant dense<0.000000e+00> : vector<8x96xf32>
    %7 = tpu.matmul %5, %6, %cst {dimension_numbers = #tpu.dot_dimension_numbers<[1], [0], [0], [1], [0, 0, 1, 1], [], []>} : vector<8x32xbf16>, vector<32x96xbf16>, vector<8x96xf32> -> vector<8x96xf32>
    %8 = arith.addf %3, %7 : vector<8x96xf32>
    %c0_7 = arith.constant 0 : index
    %c0_8 = arith.constant 0 : index
    %9 = vector.load %arg8[%c0_7, %c0_8] : memref<8x96xf32, #tpu.memory_space<vmem>>, vector<8x96xf32>
    tpu.vector_store %arg8[%c0_7, %c0_8], %8 {strides = array<i32>} : memref<8x96xf32, #tpu.memory_space<vmem>>, vector<8x96xf32>,
    %c0_i32_9 = arith.constant 0 : i32
    %10 = arith.cmpi eq, %arg3, %c0_i32_9 : i32
    %11 = arith.extui %10 : i1 to i32
    %c0_i32_10 = arith.constant 0 : i32
    %12 = arith.cmpi ne, %11, %c0_i32_10 : i32
    scf.if %12 {
      %c0_11 = arith.constant 0 : index
      %c0_12 = arith.constant 0 : index
      %13 = vector.load %arg8[%c0_11, %c0_12] : memref<8x96xf32, #tpu.memory_space<vmem>>, vector<8x96xf32>
      %c0_13 = arith.constant 0 : index
      %c0_14 = arith.constant 0 : index
      %14 = vector.load %arg6[%c0_13, %c0_14] : memref<1x96xf32, #tpu.memory_space<vmem>>, vector<1x96xf32>
      %15 = vector.broadcast %14 : vector<1x96xf32> to vector<8x96xf32>
      %16 = arith.addf %13, %15 : vector<8x96xf32>
      %17 = arith.truncf %16 : vector<8x96xf32> to vector<8x96xbf16>
      %c0_15 = arith.constant 0 : index
      %c0_16 = arith.constant 0 : index
      %c0_17 = arith.constant 0 : index
      %18 = vector.load %arg7[%c0_15, %c0_16, %c0_17] : memref<1x8x96xbf16, #tpu.memory_space<vmem>>, vector<1x8x96xbf16>
      %19 = vector.shape_cast %18 : vector<1x8x96xbf16> to vector<8x96xbf16>
      %20 = vector.shape_cast %17 : vector<8x96xbf16> to vector<1x8x96xbf16>
      tpu.vector_store %arg7[%c0_15, %c0_16, %c0_17], %20 {strides = array<i32>} : memref<1x8x96xbf16, #tpu.memory_space<vmem>>, vector<1x8x96xbf16>,
    } else {
    }
    return
  }
  func.func @transform_0(%arg0: i32, %arg1: i32, %arg2: i32, %arg3: i32) -> (i32, i32, i32) {
    %c0_i32 = arith.constant 0 : i32
    return %arg1, %arg2, %arg3 : i32, i32, i32
  }
  func.func @transform_1(%arg0: i32, %arg1: i32, %arg2: i32, %arg3: i32) -> (i32, i32) {
    %c0_i32 = arith.constant 0 : i32
    return %arg3, %arg0 : i32, i32
  }
  func.func @transform_2(%arg0: i32, %arg1: i32, %arg2: i32, %arg3: i32) -> (i32, i32) {
    %c0_i32 = arith.constant 0 : i32
    %c0_i32_0 = arith.constant 0 : i32
    return %c0_i32, %arg0 : i32, i32
  }
  func.func @transform_3(%arg0: i32, %arg1: i32, %arg2: i32, %arg3: i32) -> (i32, i32, i32) {
    %c0_i32 = arith.constant 0 : i32
    return %arg1, %arg2, %arg0 : i32, i32, i32
  }
}

</mosaic_0001>

<llo_original>
// kernel: tpu_custom_call.1
$region0: #{tpu_custom_call.1}
  #allocation0 [shape = 'u32[]', space=smem, size = 0x4, offset = 0x4, fixed_abs, tag = 'smem constant byte address 0x4 - core index']
  #allocation1 [shape = 'u32[144,128]{1,0:T(1,128)}', space=vmem, size = 0x12000, scoped, tag = 'internal scratch']
  #allocation2 [shape = 'f32[8,96]{1,0:T(8,128)}', space=vmem, size = 0x1000, scoped, tag = 'scratch operand']
  %s0 = inlined_call_operand.hbm [shape: bf16[2,8,32], index: 0, kind: input, shape index: {}]
  %s1 = inlined_call_operand.hbm [shape: bf16[32,96], index: 1, kind: input, shape index: {}]
  %s2 = inlined_call_operand.hbm [shape: f32[1,96], index: 2, kind: input, shape index: {}]
  %s3 = inlined_call_operand.hbm [shape: bf16[2,8,96], index: 3, kind: output, shape index: {}]
  %s4 = sld [smem:[#allocation0]]
  $region65: #{tpu_custom_call.1} parent=0
    _
  %s6 = ssub.s32 1, %s4
  %s7 = scalar_select 0, %s6, %s4
  $region1: #{tpu_custom_call.1} parent=0
    #allocation3 [shape = 'u8[4096]{0}', space=vmem, size = 0x1000, scoped, tag = 'input window, operand 0']
    #allocation4 [shape = 's32[2]{0}', space=sflag, size = 0x8, scoped, tag = 'scoped memory for tpu_custom_call.1']
    #allocation5 [shape = 's32[2]{0}', space=sflag, size = 0x8, scoped, tag = 'scoped memory for tpu_custom_call.1']
    #allocation6 [shape = 'u8[8192]{0}', space=vmem, size = 0x2000, scoped, tag = 'input window, operand 1, single buffered']
    #allocation7 [shape = 's32[1]{0}', space=sflag, size = 0x4, scoped, tag = 'scoped memory for tpu_custom_call.1']
    #allocation8 [shape = 'u8[512]{0}', space=vmem, size = 0x400, scoped, tag = 'input window, operand 2, single buffered']
    #allocation9 [shape = 'u8[4096]{0}', space=vmem, size = 0x1000, scoped, tag = 'output window, operand 0']
    %8 = vsyncpa [#allocation4], 0
    %s9 = scalar_lea.sflag [#allocation4], 1
    %10 = vsyncpa %s9, 0
    %11 = vsyncpa [#allocation7], 0
    %12 = vsyncpa [#allocation5], 0
    %s13 = scalar_lea.sflag [#allocation5], 1
    %14 = vsyncpa %s13, 0
    loop: start=0, step=1, limit=4
    $region2: #{tpu_custom_call.1} parent=1 // loop_pre_header
      _
    $region3: #{tpu_custom_call.1} parent=1 // loop_header
      %s16 = sphi 0, %s20
      %p17 = scmp.ge.s32.totalorder %s16, 4
      %s23 = sphi 0, %s49
      %s24 = sphi 0, %s45
      %s25 = sphi 0, %s41
      %s26 = sphi 0, %s37
      %s27 = sphi 0, %s23
      %s28 = sphi 0, %s24
      %s29 = sphi 0, %s25
      %s30 = sphi 0, %s26
      %s31 = sphi 0, %s27
      %s32 = sphi 0, %s28
      %s33 = sphi 0, %s29
      %s34 = sphi 0, %s30
      %s56 = sphi 0, %s58
      %s59 = sphi 0, %s56
      %s60 = sphi 0, %s59
      %s76 = sphi 0, %s60
      %s84 = sphi 0, %s86
      %s87 = sphi 0, %s84
      %s88 = sphi 0, %s87
      %s104 = sphi 0, %s88
      %s110 = sphi 0, %s112
      %s113 = sphi 0, %s110
      %s114 = sphi 0, %s113
      %s130 = sphi 0, %s114
      %s140 = sphi 0, %s142
      %s143 = sphi 0, %s140
      %s144 = sphi 0, %s143
      %s160 = sphi 0, %s144
    $region4: #{tpu_custom_call.1} parent=1 // loop_header_branch
      %19 = sbr.rel (%p17) target = $region8
    $region5: #{tpu_custom_call.1} parent=1 // loop_body
      %s21 = ssub.s32 %s16, 1
      %s22 = ssub.s32 %s16, 2
      %s35 = sadd.s32 1, %s26
      %p36 = scmp.ge.s32.totalorder %s35, 1
      %s37 = scalar_select %p36, 0, %s35
      %s38 = sadd.s32 1, %s25
      %s39 = scalar_select %p36, %s38, %s25
      %p40 = scmp.ge.s32.totalorder %s39, 1
      %s41 = scalar_select %p40, 0, %s39
      %s42 = sadd.s32 1, %s24
      %s43 = scalar_select %p40, %s42, %s24
      %p44 = scmp.ge.s32.totalorder %s43, 2
      %s45 = scalar_select %p44, 0, %s43
      %s46 = sadd.s32 1, %s23
      %s47 = scalar_select %p44, %s46, %s23
      %p48 = scmp.ge.s32.totalorder %s47, 1
      %s49 = scalar_select %p48, 0, %s47
      %s50 = ssub.s32 %s24, %s45
      %s51 = ssub.s32 %s25, %s41
      %s52 = sor.u32 %s50, %s51
      %s53 = ssub.s32 %s26, %s37
      %s54 = sor.u32 %s52, %s53
      %p55 = scmp.eq.s32.totalorder %s54, 0
      %s57 = sadd.s32 %s56, 1
      %s58 = scalar_select %p55, %s56, %s57
      %p61 = pneg %p55
      %p62 = scmp.eq.s32.totalorder %s16, 1
      %p63 = por %p61, %p62
      %p64 = scmp.ne.s32.totalorder %s56, %s59
      %p65 = scmp.eq.s32.totalorder %s16, 0
      %p66 = por %p64, %p65
      %p67 = scmp.ne.s32.totalorder %s56, %s59
      %p68 = scmp.eq.s32.totalorder %s21, 1
      %p69 = por %p67, %p68
      %p70 = scmp.ne.s32.totalorder %s59, %s60
      %p71 = scmp.eq.s32.totalorder %s21, 0
      %p72 = por %p70, %p71
      %p73 = scmp.ne.s32.totalorder %s59, %s60
      %p74 = scmp.eq.s32.totalorder %s22, 1
      %p75 = por %p73, %p74
      %p77 = scmp.ne.s32.totalorder %s60, %s76
      %p78 = scmp.eq.s32.totalorder %s22, 0
      %p79 = por %p77, %p78
      %s80 = ssub.s32 %s26, %s37
      %s81 = ssub.s32 %s23, %s49
      %s82 = sor.u32 %s80, %s81
      %p83 = scmp.eq.s32.totalorder %s82, 0
      %s85 = sadd.s32 %s84, 1
      %s86 = scalar_select %p83, %s84, %s85
      %p89 = pneg %p83
      %p90 = scmp.eq.s32.totalorder %s16, 1
      %p91 = por %p89, %p90
      %p92 = scmp.ne.s32.totalorder %s84, %s87
      %p93 = scmp.eq.s32.totalorder %s16, 0
      %p94 = por %p92, %p93
      %p95 = scmp.ne.s32.totalorder %s84, %s87
      %p96 = scmp.eq.s32.totalorder %s21, 1
      %p97 = por %p95, %p96
      %p98 = scmp.ne.s32.totalorder %s87, %s88
      %p99 = scmp.eq.s32.totalorder %s21, 0
      %p100 = por %p98, %p99
      %p101 = scmp.ne.s32.totalorder %s87, %s88
      %p102 = scmp.eq.s32.totalorder %s22, 1
      %p103 = por %p101, %p102
      %p105 = scmp.ne.s32.totalorder %s88, %s104
      %p106 = scmp.eq.s32.totalorder %s22, 0
      %p107 = por %p105, %p106
      %s108 = ssub.s32 %s23, %s49
      %p109 = scmp.eq.s32.totalorder %s108, 0
      %s111 = sadd.s32 %s110, 1
      %s112 = scalar_select %p109, %s110, %s111
      %p115 = pneg %p109
      %p116 = scmp.eq.s32.totalorder %s16, 1
      %p117 = por %p115, %p116
      %p118 = scmp.ne.s32.totalorder %s110, %s113
      %p119 = scmp.eq.s32.totalorder %s16, 0
      %p120 = por %p118, %p119
      %p121 = scmp.ne.s32.totalorder %s110, %s113
      %p122 = scmp.eq.s32.totalorder %s21, 1
      %p123 = por %p121, %p122
      %p124 = scmp.ne.s32.totalorder %s113, %s114
      %p125 = scmp.eq.s32.totalorder %s21, 0
      %p126 = por %p124, %p125
      %p127 = scmp.ne.s32.totalorder %s113, %s114
      %p128 = scmp.eq.s32.totalorder %s22, 1
      %p129 = por %p127, %p128
      %p131 = scmp.ne.s32.totalorder %s114, %s130
      %p132 = scmp.eq.s32.totalorder %s22, 0
      %p133 = por %p131, %p132
      %s134 = ssub.s32 %s24, %s45
      %s135 = ssub.s32 %s25, %s41
      %s136 = sor.u32 %s134, %s135
      %s137 = ssub.s32 %s23, %s49
      %s138 = sor.u32 %s136, %s137
      %p139 = scmp.eq.s32.totalorder %s138, 0
      %s141 = sadd.s32 %s140, 1
      %s142 = scalar_select %p139, %s140, %s141
      %p145 = pneg %p139
      %p146 = scmp.eq.s32.totalorder %s16, 1
      %p147 = por %p145, %p146
      %p148 = scmp.ne.s32.totalorder %s140, %s143
      %p149 = scmp.eq.s32.totalorder %s16, 0
      %p150 = por %p148, %p149
      %p151 = scmp.ne.s32.totalorder %s140, %s143
      %p152 = scmp.eq.s32.totalorder %s21, 1
      %p153 = por %p151, %p152
      %p154 = scmp.ne.s32.totalorder %s143, %s144
      %p155 = scmp.eq.s32.totalorder %s21, 0
      %p156 = por %p154, %p155
      %p157 = scmp.ne.s32.totalorder %s143, %s144
      %p158 = scmp.eq.s32.totalorder %s22, 1
      %p159 = por %p157, %p158
      %p161 = scmp.ne.s32.totalorder %s144, %s160
      %p162 = scmp.eq.s32.totalorder %s22, 0
      %p163 = por %p161, %p162
      %p164 = scmp.le.s32.totalorder 1, %s16
      %p165 = scmp.lt.s32.totalorder %s16, 3
      %p166 = pnand %p164, %p165
      %p167 = pneg %p166
      // Predicated region
      $region9: #{tpu_custom_call.1} parent=5 // pred_check
        _
      $region10: #{tpu_custom_call.1} parent=5 // pred_check_branch
        %169 = sbr.rel (%p166) target = $region12
      $region11: #{tpu_custom_call.1} parent=5 // pred_region
        %s170 = ssub.s32 %s16, 1
        // Predicated region
        $region13: #{tpu_custom_call.1} parent=11 // pred_check
          %p171 = pneg %p100
        $region14: #{tpu_custom_call.1} parent=11 // pred_check_branch
          %173 = sbr.rel (%p171) target = $region16
        $region15: #{tpu_custom_call.1} parent=11 // pred_region
          %s174 = smul.u32 4, %s30
          %s176 = ssub.s32 256, 256
          %177 = vsyncadd [#allocation7], %s176
          %s178 = sadd.s32 %s27, %s174
          %s179 = smul.addr %s178, 64
          %s180 = scalar_lea.hbm %s1, %s179
          %s181 = sshll.u32 [#allocation6], 4
          %s182 = int_to_ptr.vmem [resolvable:$true] %s181
          %187 = dma.hbm_to_vmem [thread:$0]  %s180, 256, %s182, [#allocation7], 64, 64, 4
        $region16: #{tpu_custom_call.1} parent=11 // pred_fallthru
          _
        // Predicated region
        $region17: #{tpu_custom_call.1} parent=11 // pred_check
          %p188 = pneg %p126
        $region18: #{tpu_custom_call.1} parent=11 // pred_check_branch
          %190 = sbr.rel (%p188) target = $region20
        $region19: #{tpu_custom_call.1} parent=11 // pred_region
          %s192 = ssub.s32 16, 16
          %193 = vsyncadd [#allocation7], %s192
          %s194 = smul.addr %s27, 16
          %s195 = scalar_lea.hbm %s2, %s194
          %s197 = sshll.u32 [#allocation8], 4
          %s198 = int_to_ptr.vmem [resolvable:$true] %s197
          %200 = dma.hbm_to_vmem [thread:$0]  %s195, 16, %s198, [#allocation7]
        $region20: #{tpu_custom_call.1} parent=11 // pred_fallthru
          _
      $region12: #{tpu_custom_call.1} parent=5 // pred_fallthru
        _
      %p201 = scmp.lt.s32.totalorder %s16, 2
      // Predicated region
      $region21: #{tpu_custom_call.1} parent=5 // pred_check
        %p202 = pneg %p201
      $region22: #{tpu_custom_call.1} parent=5 // pred_check_branch
        %204 = sbr.rel (%p202) target = $region24
      $region23: #{tpu_custom_call.1} parent=5 // pred_region
        // Predicated region
        $region25: #{tpu_custom_call.1} parent=23 // pred_check
          %p205 = pneg %p66
        $region26: #{tpu_custom_call.1} parent=23 // pred_check_branch
          %207 = sbr.rel (%p205) target = $region28
        $region27: #{tpu_custom_call.1} parent=23 // pred_region
          %s208 = sand.u32 %s56, 1
          %s209 = scalar_lea.sflag [#allocation4], %s208
          %s210 = sand.u32 %s56, 1
          %s211 = smul.addr %s210, 4
          %s212 = scalar_lea.vmem [#allocation3], %s211
          %s214 = ssub.s32 64, 64
          %215 = vsyncadd %s209, %s214
          %s216 = sadd.s32 %s26, %s25
          %s217 = sadd.s32 %s216, %s24
          %s218 = smul.addr %s217, 64
          %s219 = scalar_lea.hbm %s0, %s218
          %s221 = sshll.u32 %s212, 4
          %s222 = int_to_ptr.vmem [resolvable:$true] %s221
          %224 = dma.hbm_to_vmem [thread:$0]  %s219, 64, %s222, %s209
        $region28: #{tpu_custom_call.1} parent=23 // pred_fallthru
          _
      $region24: #{tpu_custom_call.1} parent=5 // pred_fallthru
        _
      %p225 = scmp.le.s32.totalorder 1, %s16
      %p226 = scmp.lt.s32.totalorder %s16, 3
      %p227 = pnand %p225, %p226
      %p228 = pneg %p227
      // Predicated region
      $region29: #{tpu_custom_call.1} parent=5 // pred_check
        _
      $region30: #{tpu_custom_call.1} parent=5 // pred_check_branch
        %230 = sbr.rel (%p227) target = $region32
      $region31: #{tpu_custom_call.1} parent=5 // pred_region
        %s231 = ssub.s32 %s16, 1
        %s232 = sand.u32 %s59, 1
        %s233 = scalar_lea.sflag [#allocation4], %s232
        %s234 = sand.u32 %s59, 1
        %s235 = smul.addr %s234, 4
        %s236 = scalar_lea.vmem [#allocation3], %s235
        // Predicated region
        $region33: #{tpu_custom_call.1} parent=31 // pred_check
          %p237 = pneg %p72
        $region34: #{tpu_custom_call.1} parent=31 // pred_check_branch
          %239 = sbr.rel (%p237) target = $region36
        $region35: #{tpu_custom_call.1} parent=31 // pred_region
          %240 = dma.done %s233, 64
        $region36: #{tpu_custom_call.1} parent=31 // pred_fallthru
          _
        // Predicated region
        $region37: #{tpu_custom_call.1} parent=31 // pred_check
          %p241 = pneg %p100
        $region38: #{tpu_custom_call.1} parent=31 // pred_check_branch
          %243 = sbr.rel (%p241) target = $region40
        $region39: #{tpu_custom_call.1} parent=31 // pred_region
          %244 = dma.done [#allocation7], 256
        $region40: #{tpu_custom_call.1} parent=31 // pred_fallthru
          _
        // Predicated region
        $region41: #{tpu_custom_call.1} parent=31 // pred_check
          %p245 = pneg %p126
        $region42: #{tpu_custom_call.1} parent=31 // pred_check_branch
          %247 = sbr.rel (%p245) target = $region44
        $region43: #{tpu_custom_call.1} parent=31 // pred_region
          %248 = dma.done [#allocation7], 16
        $region44: #{tpu_custom_call.1} parent=31 // pred_fallthru
          _
        %s249 = sand.u32 %s59, 1
        %s250 = scalar_lea.sflag [#allocation4], %s249
        %s251 = sand.u32 %s59, 1
        %s252 = smul.addr %s251, 4
        %s253 = scalar_lea.vmem [#allocation3], %s252
        %p254 = pneg %p72
        %p255 = pneg %p69
        %p256 = pneg %p100
        %p257 = pneg %p97
        %p258 = pneg %p126
        %p259 = pneg %p123
        %p260 = pneg %p156
        %p261 = pneg %p153
        %s262 = sand.u32 %s143, 1
        %s263 = scalar_lea.sflag [#allocation5], %s262
        %s264 = sand.u32 %s143, 1
        %s265 = smul.addr %s264, 4
        %s266 = scalar_lea.vmem [#allocation9], %s265
        %s267 = smul.u32 4, %s30
        %p269 = scmp.eq.s32.totalorder %s30, 0
        // Predicated region
        $region45: #{tpu_custom_call.1} parent=31 // pred_check
          %p270 = pneg %p269
        $region46: #{tpu_custom_call.1} parent=31 // pred_check_branch
          %272 = sbr.rel (%p270) target = $region48
        $region47: #{tpu_custom_call.1} parent=31 // pred_region
          %vm273 = vcmask 785408
          %274 = vst.msk [vmem:[#allocation2] sm:$0xff] %vm273, 0.0
        $region48: #{tpu_custom_call.1} parent=31 // pred_fallthru
          _
        %v275 = vld [vmem:[#allocation2] sm:$0xff]
        %v276 = vld [vmem:[%s236] sm:$0xf]
        %v277 = vld [vmem:[#allocation6] sm:$0xf]
        %v278 = vld [vmem:[#allocation6 + $0x4] sm:$0xf]
        %v279 = vld [vmem:[#allocation6 + $0x8] sm:$0xf]
        %v280 = vld [vmem:[#allocation6 + $0xc] sm:$0xf]
        %v285 = vunpack.c.l.b16 %v277
        %v286 = vunpack.c.l.b16 %v278
        %v287 = vunpack.c.l.b16 %v279
        %v288 = vunpack.c.l.b16 %v280
        %v289 = vpack.c.b16 %v286, %v285
        %v290 = vpack.c.b16 %v288, %v287
        %vm293 = vcmask 261120
        %v295 = vsel %vm293, %v276, 0
        %297 = vmatprep.subr.bf16.mxu0 0
        %298 = vmatpush1.bf16.msra.mxu0 %v289
        %299 = vmatprep.subr.bf16.mxu0 0
        %300 = vmatpush1.bf16.msra.mxu0 %v290
        %301 = vmatprep.subr.bf16.mxu0 0
        %302 = vmatpush1.bf16.msra.mxu0 0
        %303 = vmatprep.subr.bf16.mxu0 0
        %304 = vmatpush1.bf16.msra.mxu0 0
        %305 = vmatprep.subr.bf16.mxu0 0
        %306 = vmatpush1.bf16.msra.mxu0 0
        %307 = vmatprep.subr.bf16.mxu0 0
        %308 = vmatpush1.bf16.msra.mxu0 0
        %309 = vmatprep.subr.bf16.mxu0 0
        %310 = vmatpush1.bf16.msra.mxu0 0
        %311 = vmatprep.subr.bf16.mxu0 0
        %312 = vmatpush1.bf16.msra.mxu0 0
        %313 = vmatprep.subr.bf16.mxu0 0
        %314 = vmatpush1.bf16.msra.mxu0 0
        %315 = vmatprep.subr.bf16.mxu0 0
        %316 = vmatpush1.bf16.msra.mxu0 0
        %317 = vmatprep.subr.bf16.mxu0 0
        %318 = vmatpush1.bf16.msra.mxu0 0
        %319 = vmatprep.subr.bf16.mxu0 0
        %320 = vmatpush1.bf16.msra.mxu0 0
        %321 = vmatprep.subr.bf16.mxu0 0
        %322 = vmatpush1.bf16.msra.mxu0 0
        %323 = vmatprep.subr.bf16.mxu0 0
        %324 = vmatpush1.bf16.msra.mxu0 0
        %325 = vmatprep.subr.bf16.mxu0 0
        %326 = vmatpush1.bf16.msra.mxu0 0
        %327 = vmatprep.subr.bf16.mxu0 0
        %328 = vmatpush1.bf16.msra.mxu0 0
        %329 = vmatprep.mubr.bf16.mxu0 0
        %330 = vmatmul.mubr.bf16.gmra.mrb[0].mxu0 %v295
        %v331 = vpop.f32.mrb[0].mxu0
        %v332 = vadd.f32 0.0, %v331
        %v333 = vpop.f32.mrb[0].mxu0
        %v334 = vpop.f32.mrb[0].mxu0
        %v335 = vpop.f32.mrb[0].mxu0
        %336 = vdwg.mxu0
        %v337 = vadd.f32 %v275, %v332
        %vm338 = vcmask 785408
        %339 = vst.msk [vmem:[#allocation2] sm:$0xff] %vm338, %v337
        // Predicated region
        $region49: #{tpu_custom_call.1} parent=31 // pred_check
          %p340 = pneg %p269
        $region50: #{tpu_custom_call.1} parent=31 // pred_check_branch
          %342 = sbr.rel (%p340) target = $region52
        $region51: #{tpu_custom_call.1} parent=31 // pred_region
          %v343 = vld [vmem:[#allocation2] sm:$0xff]
          %v344 = vld [vmem:[#allocation8] sm:$0x1]
          %v346 = vlaneseq
          %v347 = vshrl.u32 %v346, 7
          %v348 = vsub.s32 0, %v347
          %v349 = vrot.slane %v344, %v348
          %v351 = vadd.f32 %v343, %v349
          %v352 = vpack.c.bf16 %v351, %v351
          %vm353 = vcmask 781312
          %354 = vst.msk [vmem:[%s266] sm:$0xf] %vm353, %v352
        $region52: #{tpu_custom_call.1} parent=31 // pred_fallthru
          _
        %s355 = sand.u32 %s143, 1
        %s356 = scalar_lea.sflag [#allocation5], %s355
        %s357 = sand.u32 %s143, 1
        %s358 = smul.addr %s357, 4
        %s359 = scalar_lea.vmem [#allocation9], %s358
        // Predicated region
        $region53: #{tpu_custom_call.1} parent=31 // pred_check
          %p360 = pneg %p153
        $region54: #{tpu_custom_call.1} parent=31 // pred_check_branch
          %362 = sbr.rel (%p360) target = $region56
        $region55: #{tpu_custom_call.1} parent=31 // pred_region
          %s364 = ssub.s32 64, 64
          %365 = vsyncadd %s356, %s364
          %s366 = sadd.s32 %s27, %s29
          %s367 = sadd.s32 %s366, %s28
          %s368 = smul.addr %s367, 64
          %s369 = scalar_lea.hbm %s3, %s368
          %s371 = sshll.u32 %s359, 4
          %s372 = int_to_ptr.vmem [resolvable:$true] %s371
          %374 = dma.vmem_to_hbm [thread:$0]  %s372, 64, %s369, %s356
        $region56: #{tpu_custom_call.1} parent=31 // pred_fallthru
          _
      $region32: #{tpu_custom_call.1} parent=5 // pred_fallthru
        _
      %p375 = scmp.le.s32.totalorder 2, %s16
      // Predicated region
      $region57: #{tpu_custom_call.1} parent=5 // pred_check
        %p376 = pneg %p375
      $region58: #{tpu_custom_call.1} parent=5 // pred_check_branch
        %378 = sbr.rel (%p376) target = $region60
      $region59: #{tpu_custom_call.1} parent=5 // pred_region
        %s379 = ssub.s32 %s16, 2
        // Predicated region
        $region61: #{tpu_custom_call.1} parent=59 // pred_check
          %p380 = pneg %p159
        $region62: #{tpu_custom_call.1} parent=59 // pred_check_branch
          %382 = sbr.rel (%p380) target = $region64
        $region63: #{tpu_custom_call.1} parent=59 // pred_region
          %s383 = sand.u32 %s144, 1
          %s384 = scalar_lea.sflag [#allocation5], %s383
          %s385 = sand.u32 %s144, 1
          %s386 = smul.addr %s385, 4
          %s387 = scalar_lea.vmem [#allocation9], %s386
          %388 = dma.done %s384, 64
        $region64: #{tpu_custom_call.1} parent=59 // pred_fallthru
          _
      $region60: #{tpu_custom_call.1} parent=5 // pred_fallthru
        _
    $region6: #{tpu_custom_call.1} parent=1 // loop_footer
      %s20 = sadd.s32 1, %s16
    $region7: #{tpu_custom_call.1} parent=1 // loop_footer_branch
      %15 = sbr.rel target = $region3
    $region8: #{tpu_custom_call.1} parent=1 // loop_exit
      _
    %389 = vsyncpa [#allocation4], 1
    %s390 = scalar_lea.sflag [#allocation4], 1
    %391 = vsyncpa %s390, 1
    %392 = vsyncpa [#allocation7], 1
    %393 = vsyncpa [#allocation5], 1
    %s394 = scalar_lea.sflag [#allocation5], 1
    %395 = vsyncpa %s394, 1

</llo_original>
